<compile_context>
chip_gen: v6e
topology: v6e:2x2x1
jax: 0.10.0
libtpu: 0.0.40
codegen_flags: <defaults>
</compile_context>

<pallas_src>
import functools
import math

import jax
import jax.numpy as jnp
from jax.experimental import pallas as pl
from jax.experimental.pallas import tpu as pltpu


def _pair(v):
    if isinstance(v, (tuple, list)):
        return int(v[0]), int(v[1])
    return int(v), int(v)


def _round_up(v, m):
    return ((v + m - 1) // m) * m


def _make_kernel(taps, c, tm, chunk, use_halo):
    """Fused conv(+folded BN)+ReLU kernel producing one (OC, tm) output tile.

    taps: tuple of (channel_block, lane_offset) per conv tap (python constants).
    c:    padded channel count per channel block.
    """
    kk = len(taps)
    n_chunks = tm // chunk

    def body(x_ref, h_ref, w_ref, b_ref, o_ref, slab_ref):
        for ci in range(n_chunks):
            c0 = ci * chunk
            if kk == 1:
                cb, d = taps[0]
                slab = x_ref[0, cb * c:(cb + 1) * c, c0 + d:c0 + d + chunk]
            else:
                # Build the (KK*C, chunk) stacked slab: one aligned sublane
                # block per tap.  Only slabs that cross the tile boundary
                # (possible only in the last chunk) touch the halo block.
                for ti, (cb, d) in enumerate(taps):
                    rows = slice(ti * c, (ti + 1) * c)
                    cbs = slice(cb * c, (cb + 1) * c)
                    start = c0 + d
                    avail = tm - start
                    if avail >= chunk:
                        slab_ref[rows, :] = x_ref[0, cbs, start:start + chunk]
                    elif avail <= 0:
                        slab_ref[rows, :] = h_ref[0, cbs,
                                                  start - tm:start - tm + chunk]
                    else:
                        slab_ref[rows, :avail] = x_ref[0, cbs, start:tm]
                        slab_ref[rows, avail:] = h_ref[0, cbs, :chunk - avail]
                slab = slab_ref[...]
            # Single full-depth MXU matmul (K = KK*C), f32 accumulation.
            y = jnp.dot(w_ref[...], slab, preferred_element_type=jnp.float32)
            y = jnp.maximum(y + b_ref[...], 0.0)
            o_ref[0, :, c0:c0 + chunk] = y.astype(o_ref.dtype)

    if kk == 1:
        def kernel(x_ref, w_ref, b_ref, o_ref):
            body(x_ref, None, w_ref, b_ref, o_ref, None)
    elif use_halo:
        def kernel(x_ref, h_ref, w_ref, b_ref, o_ref, slab_ref):
            body(x_ref, h_ref, w_ref, b_ref, o_ref, slab_ref)
    else:
        def kernel(x_ref, w_ref, b_ref, o_ref, slab_ref):
            body(x_ref, None, w_ref, b_ref, o_ref, slab_ref)
    return kernel


@functools.partial(
    jax.jit,
    static_argnames=("k", "s", "p", "tm", "chunk", "compute_dtype", "out_dtype"))
def conv_block_forward(x, conv_w, conv_b, bn_gamma, bn_beta, bn_mean, bn_var,
                       *, k, s, p, tm=1024, chunk=256,
                       compute_dtype=jnp.bfloat16, out_dtype=jnp.float32):
    """ConvBlock forward: relu(bn(conv(x))), BN in inference mode. x is NCHW f32."""
    eps = 1e-5
    kh, kw = _pair(k)
    sh, sw = _pair(s)
    ph, pw = _pair(p)
    n, c, h, w = x.shape
    oc = conv_w.shape[0]
    hp, wp = h + 2 * ph, w + 2 * pw
    oh = (hp - kh) // sh + 1
    ow = (wp - kw) // sw + 1
    ah, aw = -(-hp // sh), -(-wp // sw)      # phase-gathered (strided) grid
    kk = kh * kw

    csize = jnp.dtype(compute_dtype).itemsize
    sub = 8 * (4 // csize)                   # sublane packing: f32->8, bf16->16
    c_pad = _round_up(c, sub)
    cb_n = sh * sw                           # phase (channel-block) count
    cbc = cb_n * c_pad
    kkc = kk * c_pad

    # Per-tap constants: (phase channel block, constant lane offset).  For
    # stride 1 this degenerates to cb=0, d = r*Wp + q.
    taps = tuple(((r % sh) * sw + (q % sw), (r // sh) * aw + (q // sw))
                 for r in range(kh) for q in range(kw))
    halo = max(d for _, d in taps)
    use_halo = halo > 0
    halo_pad = _round_up(halo, 128) if use_halo else 0

    # Auto-adjust chunk / tm: 128-multiples, chunk >= halo_pad (only the last
    # chunk of a tile touches the halo block), tm divisible by both, clamped
    # to the flattened output length so tiny feature maps don't over-tile.
    chunk = max(_round_up(chunk, 128), halo_pad if use_halo else 128)
    unit = chunk if not use_halo else (chunk * halo_pad) // math.gcd(chunk, halo_pad)
    length = ah * aw
    tm = max(unit, min(_round_up(tm, unit), _round_up(length, unit)))
    n_blocks = -(-length // tm)
    out_len = n_blocks * tm
    in_len = out_len + halo_pad

    # Fold conv bias + inference BN into per-channel scale/bias; fold the scale
    # straight into the (OC, KK*C) stacked weights.
    scale = bn_gamma * jax.lax.rsqrt(bn_var + eps)
    bias = ((conv_b - bn_mean) * scale + bn_beta).reshape(oc, 1)
    bias = bias.astype(jnp.float32)
    w_s = conv_w * scale[:, None, None, None]                    # (OC, C, KH, KW)
    w_s = jnp.pad(w_s, ((0, 0), (0, c_pad - c), (0, 0), (0, 0)))
    w_s = w_s.transpose(0, 2, 3, 1).reshape(oc, kkc).astype(compute_dtype)

    # Streamed activation layout: zero-pad, phase-gather (stride>1) and flatten
    # so every conv tap is a constant lane offset into one (CB*C, flat) slab.
    # For stride 1 this is just the padded NCHW image flattened over (H, W).
    xp = jnp.pad(x.astype(compute_dtype),
                 ((0, 0), (0, c_pad - c),
                  (ph, ph + ah * sh - hp), (pw, pw + aw * sw - wp)))
    xr = xp.reshape(n, c_pad, ah, sh, aw, sw)
    stream = xr.transpose(0, 3, 5, 1, 2, 4).reshape(n, cbc, ah * aw)
    stream = jnp.pad(stream, ((0, 0), (0, 0), (0, in_len - ah * aw)))

    kernel = _make_kernel(taps, c_pad, tm, chunk, use_halo)

    in_specs = [pl.BlockSpec((1, cbc, tm), lambda b, t: (b, 0, t))]
    args = [stream]
    if use_halo:
        hb = tm // halo_pad
        # Same array, but only halo_pad lanes starting right after this tile.
        in_specs.append(
            pl.BlockSpec((1, cbc, halo_pad), lambda b, t: (b, 0, (t + 1) * hb)))
        args.append(stream)
    in_specs += [
        pl.BlockSpec((oc, kkc), lambda b, t: (0, 0)),    # resident stacked W
        pl.BlockSpec((oc, 1), lambda b, t: (0, 0)),      # resident folded bias
    ]
    args += [w_s, bias]

    scratch_shapes = []
    if kk > 1:
        scratch_shapes.append(pltpu.VMEM((kkc, chunk), compute_dtype))

    osize = jnp.dtype(out_dtype).itemsize
    vmem_bytes = (2 * cbc * (tm + halo_pad) * csize      # double-buffered inputs
                  + 2 * oc * tm * osize                  # double-buffered output
                  + oc * kkc * csize + oc * 4            # resident weights/bias
                  + kkc * chunk * csize                  # stacked-slab scratch
                  + (2 << 20))
    # Cap at 48 MiB so the same config fits v7x's 64 MiB physical VMEM; v5e/v6e
    # (128 MiB) can raise this when sweeping tm toward 2048.
    vmem_limit = int(max(32 << 20, min(2 * vmem_bytes, 48 << 20)))

    y = pl.pallas_call(
        kernel,
        out_shape=jax.ShapeDtypeStruct((n, oc, out_len), out_dtype),
        grid_spec=pltpu.PrefetchScalarGridSpec(
            num_scalar_prefetch=0,
            grid=(n, n_blocks),                # both axes parallel (megacore);
            in_specs=in_specs,                 # t carries parallelism when n small
            out_specs=pl.BlockSpec((1, oc, tm), lambda b, t: (b, 0, t)),
            scratch_shapes=scratch_shapes,
        ),
        compiler_params=pltpu.CompilerParams(
            dimension_semantics=("parallel", "parallel"),
            vmem_limit_bytes=vmem_limit),
    )(*args)

    # Valid strided output region; output is already channel-major (N, OC, ...).
    y = y[:, :, :ah * aw].reshape(n, oc, ah, aw)[:, :, :oh, :ow]
    return y


def _reference(x, conv_w, conv_b, gamma, beta, mean, var, k, s, p):
    eps = 1e-5
    kh, kw = _pair(k)
    sh, sw = _pair(s)
    ph, pw = _pair(p)
    y = jax.lax.conv_general_dilated(
        x, conv_w, window_strides=(sh, sw), padding=[(ph, ph), (pw, pw)],
        dimension_numbers=("NCHW", "OIHW", "NCHW"))
    y = y + conv_b[None, :, None, None]
    y = (y - mean[None, :, None, None]) * jax.lax.rsqrt(var + eps)[None, :, None, None]
    y = y * gamma[None, :, None, None] + beta[None, :, None, None]
    return jnp.maximum(y, 0.0)


if __name__ == "__main__":
    # Small deterministic config consistent with ConvBlock(in_c=4, out_c=8, ...).
    N, C, H, W = 2, 4, 16, 16
    OC = 8

    key = jax.random.PRNGKey(0)
    kx, kparams = jax.random.split(key)
    x = jax.random.normal(kx, (N, C, H, W), dtype=jnp.float32)

    def make_params(rng, oc, c, kh, kw):
        ks = jax.random.split(rng, 6)
        conv_w = 0.1 * jax.random.normal(ks[0], (oc, c, kh, kw), jnp.float32)
        conv_b = 0.1 * jax.random.normal(ks[1], (oc,), jnp.float32)
        gamma = 1.0 + 0.1 * jax.random.normal(ks[2], (oc,), jnp.float32)
        beta = 0.1 * jax.random.normal(ks[3], (oc,), jnp.float32)
        mean = 0.1 * jax.random.normal(ks[4], (oc,), jnp.float32)
        var = jnp.abs(1.0 + 0.1 * jax.random.normal(ks[5], (oc,), jnp.float32))
        return conv_w, conv_b, gamma, beta, mean, var

    # (k, s, p) combinations used throughout MuDeep's ConvBlocks.
    configs = [
        ((3, 3), (1, 1), (1, 1)),   # 3x3 same conv (ConvLayers / MultiScaleA)
        ((1, 1), (1, 1), (0, 0)),   # 1x1 conv (stream reducers)
        ((3, 3), (2, 2), (1, 1)),   # strided conv (Reduction) -- dedicated path
        ((1, 3), (1, 1), (0, 1)),   # 1x3 conv (MultiScaleB)
        ((3, 1), (1, 1), (1, 0)),   # 3x1 conv (MultiScaleB)
    ]
    cfg_keys = jax.random.split(kparams, len(configs))

    for (kk_, ss, pp), rng in zip(configs, cfg_keys):
        params = make_params(rng, OC, C, kk_[0], kk_[1])
        # f32 streaming path: strict check against the XLA conv reference.
        out = conv_block_forward(x, *params, k=kk_, s=ss, p=pp, tm=512,
                                 chunk=256, compute_dtype=jnp.float32)
        out = jax.block_until_ready(out)
        ref = _reference(x, *params, kk_, ss, pp)
        assert out.shape == ref.shape, (kk_, ss, pp, out.shape, ref.shape)
        err = float(jnp.max(jnp.abs(out - ref)))
        assert jnp.allclose(out, ref, atol=1e-3, rtol=1e-3), (kk_, ss, pp, err)

    # Default bf16-streaming path (f32 accumulation / epilogue): looser tol.
    params = make_params(cfg_keys[0], OC, C, 3, 3)
    ref = _reference(x, *params, (3, 3), (1, 1), (1, 1))
    out_bf16 = conv_block_forward(x, *params, k=(3, 3), s=(1, 1), p=(1, 1))
    out_bf16 = jax.block_until_ready(out_bf16)
    assert jnp.allclose(out_bf16, ref, atol=5e-2, rtol=5e-2), \
        float(jnp.max(jnp.abs(out_bf16 - ref)))

    # bf16 output option (feeds the next ConvBlock without an f32 round-trip).
    out_b = conv_block_forward(x, *params, k=(3, 3), s=(1, 1), p=(1, 1),
                               out_dtype=jnp.bfloat16)
    out_b = jax.block_until_ready(out_b)
    assert out_b.dtype == jnp.bfloat16
    assert jnp.allclose(out_b.astype(jnp.float32), ref, atol=7e-2, rtol=7e-2), \
        float(jnp.max(jnp.abs(out_b.astype(jnp.float32) - ref)))

    print("KERNEL_OK")
</pallas_src>

<mosaic_0001>
module attributes {stable_mosaic.version = 11 : i64} {
  func.func @kernel(%arg0: i32, %arg1: i32, %arg2: memref<1x8x512xf32, #tpu.memory_space<vmem>>, %arg3: memref<1x8x128xf32, #tpu.memory_space<vmem>>, %arg4: memref<8x72xf32, #tpu.memory_space<vmem>>, %arg5: memref<8x1xf32, #tpu.memory_space<vmem>>, %arg6: memref<1x8x512xf32, #tpu.memory_space<vmem>>, %arg7: memref<72x256xf32, #tpu.memory_space<vmem>>) attributes {dimension_semantics = [#tpu.dimension_semantics<parallel>, #tpu.dimension_semantics<parallel>], iteration_bounds = array<i64: 2, 1>, scalar_prefetch = 0 : i64, scratch_operands = 1 : i64, tpu.core_type = #tpu.core_type<tc>, window_params = [{transform_indices = @transform_0, window_bounds = array<i64: 1, 8, 512>}, {transform_indices = @transform_1, window_bounds = array<i64: 1, 8, 128>}, {pipeline_mode = #tpu.pipeline_mode<synchronous>, transform_indices = @transform_2, window_bounds = array<i64: 8, 72>}, {pipeline_mode = #tpu.pipeline_mode<synchronous>, transform_indices = @transform_3, window_bounds = array<i64: 8, 1>}, {transform_indices = @transform_4, window_bounds = array<i64: 1, 8, 512>}]} {
    %c0 = arith.constant 0 : index
    %c0_0 = arith.constant 0 : index
    %c0_1 = arith.constant 0 : index
    %0 = vector.load %arg2[%c0, %c0_0, %c0_1] : memref<1x8x512xf32, #tpu.memory_space<vmem>>, vector<1x8x256xf32>
    %1 = vector.shape_cast %0 : vector<1x8x256xf32> to vector<8x256xf32>
    %c0_2 = arith.constant 0 : index
    %c0_3 = arith.constant 0 : index
    %2 = vector.load %arg7[%c0_2, %c0_3] : memref<72x256xf32, #tpu.memory_space<vmem>>, vector<8x256xf32>
    tpu.vector_store %arg7[%c0_2, %c0_3], %1 {strides = array<i32>} : memref<72x256xf32, #tpu.memory_space<vmem>>, vector<8x256xf32>,
    %c0_4 = arith.constant 0 : index
    %c0_5 = arith.constant 0 : index
    %c1 = arith.constant 1 : index
    %3 = vector.load %arg2[%c0_4, %c0_5, %c1] : memref<1x8x512xf32, #tpu.memory_space<vmem>>, vector<1x8x256xf32>
    %4 = vector.shape_cast %3 : vector<1x8x256xf32> to vector<8x256xf32>
    %c8 = arith.constant 8 : index
    %c0_6 = arith.constant 0 : index
    %5 = vector.load %arg7[%c8, %c0_6] : memref<72x256xf32, #tpu.memory_space<vmem>>, vector<8x256xf32>
    tpu.vector_store %arg7[%c8, %c0_6], %4 {strides = array<i32>} : memref<72x256xf32, #tpu.memory_space<vmem>>, vector<8x256xf32>,
    %c0_7 = arith.constant 0 : index
    %c0_8 = arith.constant 0 : index
    %c2 = arith.constant 2 : index
    %6 = vector.load %arg2[%c0_7, %c0_8, %c2] : memref<1x8x512xf32, #tpu.memory_space<vmem>>, vector<1x8x256xf32>
    %7 = vector.shape_cast %6 : vector<1x8x256xf32> to vector<8x256xf32>
    %c16 = arith.constant 16 : index
    %c0_9 = arith.constant 0 : index
    %8 = vector.load %arg7[%c16, %c0_9] : memref<72x256xf32, #tpu.memory_space<vmem>>, vector<8x256xf32>
    tpu.vector_store %arg7[%c16, %c0_9], %7 {strides = array<i32>} : memref<72x256xf32, #tpu.memory_space<vmem>>, vector<8x256xf32>,
    %c0_10 = arith.constant 0 : index
    %c0_11 = arith.constant 0 : index
    %c18 = arith.constant 18 : index
    %9 = vector.load %arg2[%c0_10, %c0_11, %c18] : memref<1x8x512xf32, #tpu.memory_space<vmem>>, vector<1x8x256xf32>
    %10 = vector.shape_cast %9 : vector<1x8x256xf32> to vector<8x256xf32>
    %c24 = arith.constant 24 : index
    %c0_12 = arith.constant 0 : index
    %11 = vector.load %arg7[%c24, %c0_12] : memref<72x256xf32, #tpu.memory_space<vmem>>, vector<8x256xf32>
    tpu.vector_store %arg7[%c24, %c0_12], %10 {strides = array<i32>} : memref<72x256xf32, #tpu.memory_space<vmem>>, vector<8x256xf32>,
    %c0_13 = arith.constant 0 : index
    %c0_14 = arith.constant 0 : index
    %c19 = arith.constant 19 : index
    %12 = vector.load %arg2[%c0_13, %c0_14, %c19] : memref<1x8x512xf32, #tpu.memory_space<vmem>>, vector<1x8x256xf32>
    %13 = vector.shape_cast %12 : vector<1x8x256xf32> to vector<8x256xf32>
    %c32 = arith.constant 32 : index
    %c0_15 = arith.constant 0 : index
    %14 = vector.load %arg7[%c32, %c0_15] : memref<72x256xf32, #tpu.memory_space<vmem>>, vector<8x256xf32>
    tpu.vector_store %arg7[%c32, %c0_15], %13 {strides = array<i32>} : memref<72x256xf32, #tpu.memory_space<vmem>>, vector<8x256xf32>,
    %c0_16 = arith.constant 0 : index
    %c0_17 = arith.constant 0 : index
    %c20 = arith.constant 20 : index
    %15 = vector.load %arg2[%c0_16, %c0_17, %c20] : memref<1x8x512xf32, #tpu.memory_space<vmem>>, vector<1x8x256xf32>
    %16 = vector.shape_cast %15 : vector<1x8x256xf32> to vector<8x256xf32>
    %c40 = arith.constant 40 : index
    %c0_18 = arith.constant 0 : index
    %17 = vector.load %arg7[%c40, %c0_18] : memref<72x256xf32, #tpu.memory_space<vmem>>, vector<8x256xf32>
    tpu.vector_store %arg7[%c40, %c0_18], %16 {strides = array<i32>} : memref<72x256xf32, #tpu.memory_space<vmem>>, vector<8x256xf32>,
    %c0_19 = arith.constant 0 : index
    %c0_20 = arith.constant 0 : index
    %c36 = arith.constant 36 : index
    %18 = vector.load %arg2[%c0_19, %c0_20, %c36] : memref<1x8x512xf32, #tpu.memory_space<vmem>>, vector<1x8x256xf32>
    %19 = vector.shape_cast %18 : vector<1x8x256xf32> to vector<8x256xf32>
    %c48 = arith.constant 48 : index
    %c0_21 = arith.constant 0 : index
    %20 = vector.load %arg7[%c48, %c0_21] : memref<72x256xf32, #tpu.memory_space<vmem>>, vector<8x256xf32>
    tpu.vector_store %arg7[%c48, %c0_21], %19 {strides = array<i32>} : memref<72x256xf32, #tpu.memory_space<vmem>>, vector<8x256xf32>,
    %c0_22 = arith.constant 0 : index
    %c0_23 = arith.constant 0 : index
    %c37 = arith.constant 37 : index
    %21 = vector.load %arg2[%c0_22, %c0_23, %c37] : memref<1x8x512xf32, #tpu.memory_space<vmem>>, vector<1x8x256xf32>
    %22 = vector.shape_cast %21 : vector<1x8x256xf32> to vector<8x256xf32>
    %c56 = arith.constant 56 : index
    %c0_24 = arith.constant 0 : index
    %23 = vector.load %arg7[%c56, %c0_24] : memref<72x256xf32, #tpu.memory_space<vmem>>, vector<8x256xf32>
    tpu.vector_store %arg7[%c56, %c0_24], %22 {strides = array<i32>} : memref<72x256xf32, #tpu.memory_space<vmem>>, vector<8x256xf32>,
    %c0_25 = arith.constant 0 : index
    %c0_26 = arith.constant 0 : index
    %c38 = arith.constant 38 : index
    %24 = vector.load %arg2[%c0_25, %c0_26, %c38] : memref<1x8x512xf32, #tpu.memory_space<vmem>>, vector<1x8x256xf32>
    %25 = vector.shape_cast %24 : vector<1x8x256xf32> to vector<8x256xf32>
    %c64 = arith.constant 64 : index
    %c0_27 = arith.constant 0 : index
    %26 = vector.load %arg7[%c64, %c0_27] : memref<72x256xf32, #tpu.memory_space<vmem>>, vector<8x256xf32>
    tpu.vector_store %arg7[%c64, %c0_27], %25 {strides = array<i32>} : memref<72x256xf32, #tpu.memory_space<vmem>>, vector<8x256xf32>,
    %c0_28 = arith.constant 0 : index
    %c0_29 = arith.constant 0 : index
    %27 = vector.load %arg7[%c0_28, %c0_29] : memref<72x256xf32, #tpu.memory_space<vmem>>, vector<72x256xf32>
    %c0_30 = arith.constant 0 : index
    %c0_31 = arith.constant 0 : index
    %28 = vector.load %arg4[%c0_30, %c0_31] : memref<8x72xf32, #tpu.memory_space<vmem>>, vector<8x72xf32>
    %cst = arith.constant dense<0.000000e+00> : vector<8x256xf32>
    %29 = tpu.matmul %28, %27, %cst {dimension_numbers = #tpu.dot_dimension_numbers<[1], [0], [0], [1], [0, 0, 1, 1], [], []>} : vector<8x72xf32>, vector<72x256xf32>, vector<8x256xf32> -> vector<8x256xf32>
    %c0_32 = arith.constant 0 : index
    %c0_33 = arith.constant 0 : index
    %30 = vector.load %arg5[%c0_32, %c0_33] : memref<8x1xf32, #tpu.memory_space<vmem>>, vector<8x1xf32>
    %31 = vector.broadcast %30 : vector<8x1xf32> to vector<8x256xf32>
    %32 = arith.addf %29, %31 : vector<8x256xf32>
    %cst_34 = arith.constant 0.000000e+00 : f32
    %33 = vector.broadcast %cst_34 : f32 to vector<8x256xf32>
    %34 = arith.maximumf %32, %33 : vector<8x256xf32>
    %c0_35 = arith.constant 0 : index
    %c0_36 = arith.constant 0 : index
    %c0_37 = arith.constant 0 : index
    %35 = vector.load %arg6[%c0_35, %c0_36, %c0_37] : memref<1x8x512xf32, #tpu.memory_space<vmem>>, vector<1x8x256xf32>
    %36 = vector.shape_cast %35 : vector<1x8x256xf32> to vector<8x256xf32>
    %37 = vector.shape_cast %34 : vector<8x256xf32> to vector<1x8x256xf32>
    tpu.vector_store %arg6[%c0_35, %c0_36, %c0_37], %37 {strides = array<i32>} : memref<1x8x512xf32, #tpu.memory_space<vmem>>, vector<1x8x256xf32>,
    %c0_38 = arith.constant 0 : index
    %c0_39 = arith.constant 0 : index
    %c256 = arith.constant 256 : index
    %38 = vector.load %arg2[%c0_38, %c0_39, %c256] : memref<1x8x512xf32, #tpu.memory_space<vmem>>, vector<1x8x256xf32>
    %39 = vector.shape_cast %38 : vector<1x8x256xf32> to vector<8x256xf32>
    %c0_40 = arith.constant 0 : index
    %c0_41 = arith.constant 0 : index
    %40 = vector.load %arg7[%c0_40, %c0_41] : memref<72x256xf32, #tpu.memory_space<vmem>>, vector<8x256xf32>
    tpu.vector_store %arg7[%c0_40, %c0_41], %39 {strides = array<i32>} : memref<72x256xf32, #tpu.memory_space<vmem>>, vector<8x256xf32>,
    %c0_42 = arith.constant 0 : index
    %c0_43 = arith.constant 0 : index
    %c257 = arith.constant 257 : index
    %41 = vector.load %arg2[%c0_42, %c0_43, %c257] : memref<1x8x512xf32, #tpu.memory_space<vmem>>, vector<1x8x255xf32>
    %42 = vector.shape_cast %41 : vector<1x8x255xf32> to vector<8x255xf32>
    %c8_44 = arith.constant 8 : index
    %c0_45 = arith.constant 0 : index
    %43 = vector.load %arg7[%c8_44, %c0_45] : memref<72x256xf32, #tpu.memory_space<vmem>>, vector<8x255xf32>
    tpu.vector_store %arg7[%c8_44, %c0_45], %42 {strides = array<i32>} : memref<72x256xf32, #tpu.memory_space<vmem>>, vector<8x255xf32>,
    %c0_46 = arith.constant 0 : index
    %c0_47 = arith.constant 0 : index
    %c0_48 = arith.constant 0 : index
    %44 = vector.load %arg3[%c0_46, %c0_47, %c0_48] : memref<1x8x128xf32, #tpu.memory_space<vmem>>, vector<1x8x1xf32>
    %45 = vector.shape_cast %44 : vector<1x8x1xf32> to vector<8x1xf32>
    %c8_49 = arith.constant 8 : index
    %c255 = arith.constant 255 : index
    %46 = vector.load %arg7[%c8_49, %c255] : memref<72x256xf32, #tpu.memory_space<vmem>>, vector<8x1xf32>
    tpu.vector_store %arg7[%c8_49, %c255], %45 {strides = array<i32>} : memref<72x256xf32, #tpu.memory_space<vmem>>, vector<8x1xf32>,
    %c0_50 = arith.constant 0 : index
    %c0_51 = arith.constant 0 : index
    %c258 = arith.constant 258 : index
    %47 = vector.load %arg2[%c0_50, %c0_51, %c258] : memref<1x8x512xf32, #tpu.memory_space<vmem>>, vector<1x8x254xf32>
    %48 = vector.shape_cast %47 : vector<1x8x254xf32> to vector<8x254xf32>
    %c16_52 = arith.constant 16 : index
    %c0_53 = arith.constant 0 : index
    %49 = vector.load %arg7[%c16_52, %c0_53] : memref<72x256xf32, #tpu.memory_space<vmem>>, vector<8x254xf32>
    tpu.vector_store %arg7[%c16_52, %c0_53], %48 {strides = array<i32>} : memref<72x256xf32, #tpu.memory_space<vmem>>, vector<8x254xf32>,
    %c0_54 = arith.constant 0 : index
    %c0_55 = arith.constant 0 : index
    %c0_56 = arith.constant 0 : index
    %50 = vector.load %arg3[%c0_54, %c0_55, %c0_56] : memref<1x8x128xf32, #tpu.memory_space<vmem>>, vector<1x8x2xf32>
    %51 = vector.shape_cast %50 : vector<1x8x2xf32> to vector<8x2xf32>
    %c16_57 = arith.constant 16 : index
    %c254 = arith.constant 254 : index
    %52 = vector.load %arg7[%c16_57, %c254] : memref<72x256xf32, #tpu.memory_space<vmem>>, vector<8x2xf32>
    tpu.vector_store %arg7[%c16_57, %c254], %51 {strides = array<i32>} : memref<72x256xf32, #tpu.memory_space<vmem>>, vector<8x2xf32>,
    %c0_58 = arith.constant 0 : index
    %c0_59 = arith.constant 0 : index
    %c274 = arith.constant 274 : index
    %53 = vector.load %arg2[%c0_58, %c0_59, %c274] : memref<1x8x512xf32, #tpu.memory_space<vmem>>, vector<1x8x238xf32>
    %54 = vector.shape_cast %53 : vector<1x8x238xf32> to vector<8x238xf32>
    %c24_60 = arith.constant 24 : index
    %c0_61 = arith.constant 0 : index
    %55 = vector.load %arg7[%c24_60, %c0_61] : memref<72x256xf32, #tpu.memory_space<vmem>>, vector<8x238xf32>
    tpu.vector_store %arg7[%c24_60, %c0_61], %54 {strides = array<i32>} : memref<72x256xf32, #tpu.memory_space<vmem>>, vector<8x238xf32>,
    %c0_62 = arith.constant 0 : index
    %c0_63 = arith.constant 0 : index
    %c0_64 = arith.constant 0 : index
    %56 = vector.load %arg3[%c0_62, %c0_63, %c0_64] : memref<1x8x128xf32, #tpu.memory_space<vmem>>, vector<1x8x18xf32>
    %57 = vector.shape_cast %56 : vector<1x8x18xf32> to vector<8x18xf32>
    %c24_65 = arith.constant 24 : index
    %c238 = arith.constant 238 : index
    %58 = vector.load %arg7[%c24_65, %c238] : memref<72x256xf32, #tpu.memory_space<vmem>>, vector<8x18xf32>
    tpu.vector_store %arg7[%c24_65, %c238], %57 {strides = array<i32>} : memref<72x256xf32, #tpu.memory_space<vmem>>, vector<8x18xf32>,
    %c0_66 = arith.constant 0 : index
    %c0_67 = arith.constant 0 : index
    %c275 = arith.constant 275 : index
    %59 = vector.load %arg2[%c0_66, %c0_67, %c275] : memref<1x8x512xf32, #tpu.memory_space<vmem>>, vector<1x8x237xf32>
    %60 = vector.shape_cast %59 : vector<1x8x237xf32> to vector<8x237xf32>
    %c32_68 = arith.constant 32 : index
    %c0_69 = arith.constant 0 : index
    %61 = vector.load %arg7[%c32_68, %c0_69] : memref<72x256xf32, #tpu.memory_space<vmem>>, vector<8x237xf32>
    tpu.vector_store %arg7[%c32_68, %c0_69], %60 {strides = array<i32>} : memref<72x256xf32, #tpu.memory_space<vmem>>, vector<8x237xf32>,
    %c0_70 = arith.constant 0 : index
    %c0_71 = arith.constant 0 : index
    %c0_72 = arith.constant 0 : index
    %62 = vector.load %arg3[%c0_70, %c0_71, %c0_72] : memref<1x8x128xf32, #tpu.memory_space<vmem>>, vector<1x8x19xf32>
    %63 = vector.shape_cast %62 : vector<1x8x19xf32> to vector<8x19xf32>
    %c32_73 = arith.constant 32 : index
    %c237 = arith.constant 237 : index
    %64 = vector.load %arg7[%c32_73, %c237] : memref<72x256xf32, #tpu.memory_space<vmem>>, vector<8x19xf32>
    tpu.vector_store %arg7[%c32_73, %c237], %63 {strides = array<i32>} : memref<72x256xf32, #tpu.memory_space<vmem>>, vector<8x19xf32>,
    %c0_74 = arith.constant 0 : index
    %c0_75 = arith.constant 0 : index
    %c276 = arith.constant 276 : index
    %65 = vector.load %arg2[%c0_74, %c0_75, %c276] : memref<1x8x512xf32, #tpu.memory_space<vmem>>, vector<1x8x236xf32>
    %66 = vector.shape_cast %65 : vector<1x8x236xf32> to vector<8x236xf32>
    %c40_76 = arith.constant 40 : index
    %c0_77 = arith.constant 0 : index
    %67 = vector.load %arg7[%c40_76, %c0_77] : memref<72x256xf32, #tpu.memory_space<vmem>>, vector<8x236xf32>
    tpu.vector_store %arg7[%c40_76, %c0_77], %66 {strides = array<i32>} : memref<72x256xf32, #tpu.memory_space<vmem>>, vector<8x236xf32>,
    %c0_78 = arith.constant 0 : index
    %c0_79 = arith.constant 0 : index
    %c0_80 = arith.constant 0 : index
    %68 = vector.load %arg3[%c0_78, %c0_79, %c0_80] : memref<1x8x128xf32, #tpu.memory_space<vmem>>, vector<1x8x20xf32>
    %69 = vector.shape_cast %68 : vector<1x8x20xf32> to vector<8x20xf32>
    %c40_81 = arith.constant 40 : index
    %c236 = arith.constant 236 : index
    %70 = vector.load %arg7[%c40_81, %c236] : memref<72x256xf32, #tpu.memory_space<vmem>>, vector<8x20xf32>
    tpu.vector_store %arg7[%c40_81, %c236], %69 {strides = array<i32>} : memref<72x256xf32, #tpu.memory_space<vmem>>, vector<8x20xf32>,
    %c0_82 = arith.constant 0 : index
    %c0_83 = arith.constant 0 : index
    %c292 = arith.constant 292 : index
    %71 = vector.load %arg2[%c0_82, %c0_83, %c292] : memref<1x8x512xf32, #tpu.memory_space<vmem>>, vector<1x8x220xf32>
    %72 = vector.shape_cast %71 : vector<1x8x220xf32> to vector<8x220xf32>
    %c48_84 = arith.constant 48 : index
    %c0_85 = arith.constant 0 : index
    %73 = vector.load %arg7[%c48_84, %c0_85] : memref<72x256xf32, #tpu.memory_space<vmem>>, vector<8x220xf32>
    tpu.vector_store %arg7[%c48_84, %c0_85], %72 {strides = array<i32>} : memref<72x256xf32, #tpu.memory_space<vmem>>, vector<8x220xf32>,
    %c0_86 = arith.constant 0 : index
    %c0_87 = arith.constant 0 : index
    %c0_88 = arith.constant 0 : index
    %74 = vector.load %arg3[%c0_86, %c0_87, %c0_88] : memref<1x8x128xf32, #tpu.memory_space<vmem>>, vector<1x8x36xf32>
    %75 = vector.shape_cast %74 : vector<1x8x36xf32> to vector<8x36xf32>
    %c48_89 = arith.constant 48 : index
    %c220 = arith.constant 220 : index
    %76 = vector.load %arg7[%c48_89, %c220] : memref<72x256xf32, #tpu.memory_space<vmem>>, vector<8x36xf32>
    tpu.vector_store %arg7[%c48_89, %c220], %75 {strides = array<i32>} : memref<72x256xf32, #tpu.memory_space<vmem>>, vector<8x36xf32>,
    %c0_90 = arith.constant 0 : index
    %c0_91 = arith.constant 0 : index
    %c293 = arith.constant 293 : index
    %77 = vector.load %arg2[%c0_90, %c0_91, %c293] : memref<1x8x512xf32, #tpu.memory_space<vmem>>, vector<1x8x219xf32>
    %78 = vector.shape_cast %77 : vector<1x8x219xf32> to vector<8x219xf32>
    %c56_92 = arith.constant 56 : index
    %c0_93 = arith.constant 0 : index
    %79 = vector.load %arg7[%c56_92, %c0_93] : memref<72x256xf32, #tpu.memory_space<vmem>>, vector<8x219xf32>
    tpu.vector_store %arg7[%c56_92, %c0_93], %78 {strides = array<i32>} : memref<72x256xf32, #tpu.memory_space<vmem>>, vector<8x219xf32>,
    %c0_94 = arith.constant 0 : index
    %c0_95 = arith.constant 0 : index
    %c0_96 = arith.constant 0 : index
    %80 = vector.load %arg3[%c0_94, %c0_95, %c0_96] : memref<1x8x128xf32, #tpu.memory_space<vmem>>, vector<1x8x37xf32>
    %81 = vector.shape_cast %80 : vector<1x8x37xf32> to vector<8x37xf32>
    %c56_97 = arith.constant 56 : index
    %c219 = arith.constant 219 : index
    %82 = vector.load %arg7[%c56_97, %c219] : memref<72x256xf32, #tpu.memory_space<vmem>>, vector<8x37xf32>
    tpu.vector_store %arg7[%c56_97, %c219], %81 {strides = array<i32>} : memref<72x256xf32, #tpu.memory_space<vmem>>, vector<8x37xf32>,
    %c0_98 = arith.constant 0 : index
    %c0_99 = arith.constant 0 : index
    %c294 = arith.constant 294 : index
    %83 = vector.load %arg2[%c0_98, %c0_99, %c294] : memref<1x8x512xf32, #tpu.memory_space<vmem>>, vector<1x8x218xf32>
    %84 = vector.shape_cast %83 : vector<1x8x218xf32> to vector<8x218xf32>
    %c64_100 = arith.constant 64 : index
    %c0_101 = arith.constant 0 : index
    %85 = vector.load %arg7[%c64_100, %c0_101] : memref<72x256xf32, #tpu.memory_space<vmem>>, vector<8x218xf32>
    tpu.vector_store %arg7[%c64_100, %c0_101], %84 {strides = array<i32>} : memref<72x256xf32, #tpu.memory_space<vmem>>, vector<8x218xf32>,
    %c0_102 = arith.constant 0 : index
    %c0_103 = arith.constant 0 : index
    %c0_104 = arith.constant 0 : index
    %86 = vector.load %arg3[%c0_102, %c0_103, %c0_104] : memref<1x8x128xf32, #tpu.memory_space<vmem>>, vector<1x8x38xf32>
    %87 = vector.shape_cast %86 : vector<1x8x38xf32> to vector<8x38xf32>
    %c64_105 = arith.constant 64 : index
    %c218 = arith.constant 218 : index
    %88 = vector.load %arg7[%c64_105, %c218] : memref<72x256xf32, #tpu.memory_space<vmem>>, vector<8x38xf32>
    tpu.vector_store %arg7[%c64_105, %c218], %87 {strides = array<i32>} : memref<72x256xf32, #tpu.memory_space<vmem>>, vector<8x38xf32>,
    %c0_106 = arith.constant 0 : index
    %c0_107 = arith.constant 0 : index
    %89 = vector.load %arg7[%c0_106, %c0_107] : memref<72x256xf32, #tpu.memory_space<vmem>>, vector<72x256xf32>
    %c0_108 = arith.constant 0 : index
    %c0_109 = arith.constant 0 : index
    %90 = vector.load %arg4[%c0_108, %c0_109] : memref<8x72xf32, #tpu.memory_space<vmem>>, vector<8x72xf32>
    %cst_110 = arith.constant dense<0.000000e+00> : vector<8x256xf32>
    %91 = tpu.matmul %90, %89, %cst_110 {dimension_numbers = #tpu.dot_dimension_numbers<[1], [0], [0], [1], [0, 0, 1, 1], [], []>} : vector<8x72xf32>, vector<72x256xf32>, vector<8x256xf32> -> vector<8x256xf32>
    %c0_111 = arith.constant 0 : index
    %c0_112 = arith.constant 0 : index
    %92 = vector.load %arg5[%c0_111, %c0_112] : memref<8x1xf32, #tpu.memory_space<vmem>>, vector<8x1xf32>
    %93 = vector.broadcast %92 : vector<8x1xf32> to vector<8x256xf32>
    %94 = arith.addf %91, %93 : vector<8x256xf32>
    %cst_113 = arith.constant 0.000000e+00 : f32
    %95 = vector.broadcast %cst_113 : f32 to vector<8x256xf32>
    %96 = arith.maximumf %94, %95 : vector<8x256xf32>
    %c0_114 = arith.constant 0 : index
    %c0_115 = arith.constant 0 : index
    %c256_116 = arith.constant 256 : index
    %97 = vector.load %arg6[%c0_114, %c0_115, %c256_116] : memref<1x8x512xf32, #tpu.memory_space<vmem>>, vector<1x8x256xf32>
    %98 = vector.shape_cast %97 : vector<1x8x256xf32> to vector<8x256xf32>
    %99 = vector.shape_cast %96 : vector<8x256xf32> to vector<1x8x256xf32>
    tpu.vector_store %arg6[%c0_114, %c0_115, %c256_116], %99 {strides = array<i32>} : memref<1x8x512xf32, #tpu.memory_space<vmem>>, vector<1x8x256xf32>,
    return
  }
  func.func @transform_0(%arg0: i32, %arg1: i32) -> (i32, i32, i32) {
    %c0_i32 = arith.constant 0 : i32
    %c0_i32_0 = arith.constant 0 : i32
    return %arg0, %c0_i32, %arg1 : i32, i32, i32
  }
  func.func @transform_1(%arg0: i32, %arg1: i32) -> (i32, i32, i32) {
    %c1_i32 = arith.constant 1 : i32
    %0 = arith.addi %arg1, %c1_i32 : i32
    %c4_i32 = arith.constant 4 : i32
    %1 = arith.muli %0, %c4_i32 : i32
    %c0_i32 = arith.constant 0 : i32
    %c0_i32_0 = arith.constant 0 : i32
    return %arg0, %c0_i32, %1 : i32, i32, i32
  }
  func.func @transform_2(%arg0: i32, %arg1: i32) -> (i32, i32) {
    %c0_i32 = arith.constant 0 : i32
    %c0_i32_0 = arith.constant 0 : i32
    %c0_i32_1 = arith.constant 0 : i32
    return %c0_i32, %c0_i32_0 : i32, i32
  }
  func.func @transform_3(%arg0: i32, %arg1: i32) -> (i32, i32) {
    %c0_i32 = arith.constant 0 : i32
    %c0_i32_0 = arith.constant 0 : i32
    %c0_i32_1 = arith.constant 0 : i32
    return %c0_i32, %c0_i32_0 : i32, i32
  }
  func.func @transform_4(%arg0: i32, %arg1: i32) -> (i32, i32, i32) {
    %c0_i32 = arith.constant 0 : i32
    %c0_i32_0 = arith.constant 0 : i32
    return %arg0, %c0_i32, %arg1 : i32, i32, i32
  }
}

</mosaic_0001>

<llo_original>
// kernel: conv_block_forward.1
$region0: #{conv_block_forward.1}
  #allocation0 [shape = 'u32[]', space=smem, size = 0x4, offset = 0x4, fixed_abs, tag = 'smem constant byte address 0x4 - core index']
  #allocation1 [shape = 'u32[144,128]{1,0:T(1,128)}', space=vmem, size = 0x12000, scoped, tag = 'internal scratch']
  #allocation2 [shape = 'f32[72,256]{1,0:T(8,128)}', space=vmem, size = 0x12000, scoped, tag = 'scratch operand']
  %s0 = inlined_call_operand.vmem [shape: f32[2,8,640], index: 0, kind: input, shape index: {}, may-alias: {0,1}]
  %s1 = inlined_call_operand.vmem [shape: f32[2,8,640], index: 1, kind: input, shape index: {}, may-alias: {0,1}]
  %s2 = inlined_call_operand.vmem [shape: f32[8,72], index: 2, kind: input, shape index: {}]
  %s3 = inlined_call_operand.vmem [shape: f32[8,1], index: 3, kind: input, shape index: {}]
  %s4 = inlined_call_operand.vmem [shape: f32[2,8,512], index: 4, kind: output, shape index: {}]
  %s5 = sld [smem:[#allocation0]]
  $region49: #{conv_block_forward.1} parent=0
    _
  %s7 = ssub.s32 1, %s5
  %s8 = scalar_select 0, %s7, %s5
  loop: start=0, step=1, limit=4
  $region2: #{conv_block_forward.1} parent=0 // loop_pre_header
    _
  $region3: #{conv_block_forward.1} parent=0 // loop_header
    %s10 = sphi 0, %s14
    %p11 = scmp.ge.s32.totalorder %s10, 4
    %s17 = sphi 0, %s29
    %s18 = sphi 0, %s25
    %s19 = sphi 0, %s17
    %s20 = sphi 0, %s18
    %s21 = sphi 0, %s19
    %s22 = sphi 0, %s20
    %s34 = sphi 0, %s36
    %s37 = sphi 0, %s34
    %s38 = sphi 0, %s37
    %s54 = sphi 0, %s38
    %s66 = sphi 0, %s68
    %s69 = sphi 0, %s66
    %s70 = sphi 0, %s69
    %s86 = sphi 0, %s70
    %s90 = sphi 0, %s90
    %s92 = sphi 0, %s90
    %s93 = sphi 0, %s92
    %s107 = sphi 0, %s93
    %s111 = sphi 0, %s111
    %s113 = sphi 0, %s111
    %s114 = sphi 0, %s113
    %s128 = sphi 0, %s114
    %s136 = sphi 0, %s138
    %s139 = sphi 0, %s136
    %s140 = sphi 0, %s139
    %s156 = sphi 0, %s140
  $region4: #{conv_block_forward.1} parent=0 // loop_header_branch
    %13 = sbr.rel (%p11) target = $region8
  $region5: #{conv_block_forward.1} parent=0 // loop_body
    %s15 = ssub.s32 %s10, 1
    %s16 = ssub.s32 %s10, 2
    %s23 = sadd.s32 1, %s18
    %p24 = scmp.ge.s32.totalorder %s23, 1
    %s25 = scalar_select %p24, 0, %s23
    %s26 = sadd.s32 1, %s17
    %s27 = scalar_select %p24, %s26, %s17
    %p28 = scmp.ge.s32.totalorder %s27, 2
    %s29 = scalar_select %p28, 0, %s27
    %s30 = ssub.s32 %s17, %s29
    %s31 = ssub.s32 %s18, %s25
    %s32 = sor.u32 %s30, %s31
    %p33 = scmp.eq.s32.totalorder %s32, 0
    %s35 = sadd.s32 %s34, 1
    %s36 = scalar_select %p33, %s34, %s35
    %p39 = pneg %p33
    %p40 = scmp.eq.s32.totalorder %s10, 1
    %p41 = por %p39, %p40
    %p42 = scmp.ne.s32.totalorder %s34, %s37
    %p43 = scmp.eq.s32.totalorder %s10, 0
    %p44 = por %p42, %p43
    %p45 = scmp.ne.s32.totalorder %s34, %s37
    %p46 = scmp.eq.s32.totalorder %s15, 1
    %p47 = por %p45, %p46
    %p48 = scmp.ne.s32.totalorder %s37, %s38
    %p49 = scmp.eq.s32.totalorder %s15, 0
    %p50 = por %p48, %p49
    %p51 = scmp.ne.s32.totalorder %s37, %s38
    %p52 = scmp.eq.s32.totalorder %s16, 1
    %p53 = por %p51, %p52
    %p55 = scmp.ne.s32.totalorder %s38, %s54
    %p56 = scmp.eq.s32.totalorder %s16, 0
    %p57 = por %p55, %p56
    %s58 = sadd.s32 %s18, 1
    %s59 = smul.u32 %s58, 4
    %s60 = sadd.s32 %s25, 1
    %s61 = smul.u32 %s60, 4
    %s62 = ssub.s32 %s17, %s29
    %s63 = ssub.s32 %s59, %s61
    %s64 = sor.u32 %s62, %s63
    %p65 = scmp.eq.s32.totalorder %s64, 0
    %s67 = sadd.s32 %s66, 1
    %s68 = scalar_select %p65, %s66, %s67
    %p71 = pneg %p65
    %p72 = scmp.eq.s32.totalorder %s10, 1
    %p73 = por %p71, %p72
    %p74 = scmp.ne.s32.totalorder %s66, %s69
    %p75 = scmp.eq.s32.totalorder %s10, 0
    %p76 = por %p74, %p75
    %p77 = scmp.ne.s32.totalorder %s66, %s69
    %p78 = scmp.eq.s32.totalorder %s15, 1
    %p79 = por %p77, %p78
    %p80 = scmp.ne.s32.totalorder %s69, %s70
    %p81 = scmp.eq.s32.totalorder %s15, 0
    %p82 = por %p80, %p81
    %p83 = scmp.ne.s32.totalorder %s69, %s70
    %p84 = scmp.eq.s32.totalorder %s16, 1
    %p85 = por %p83, %p84
    %p87 = scmp.ne.s32.totalorder %s70, %s86
    %p88 = scmp.eq.s32.totalorder %s16, 0
    %p89 = por %p87, %p88
    %s91 = sadd.s32 %s90, 1
    %p94 = scmp.eq.s32.totalorder %s10, 1
    %p95 = scmp.ne.s32.totalorder %s90, %s92
    %p96 = scmp.eq.s32.totalorder %s10, 0
    %p97 = por %p95, %p96
    %p98 = scmp.ne.s32.totalorder %s90, %s92
    %p99 = scmp.eq.s32.totalorder %s15, 1
    %p100 = por %p98, %p99
    %p101 = scmp.ne.s32.totalorder %s92, %s93
    %p102 = scmp.eq.s32.totalorder %s15, 0
    %p103 = por %p101, %p102
    %p104 = scmp.ne.s32.totalorder %s92, %s93
    %p105 = scmp.eq.s32.totalorder %s16, 1
    %p106 = por %p104, %p105
    %p108 = scmp.ne.s32.totalorder %s93, %s107
    %p109 = scmp.eq.s32.totalorder %s16, 0
    %p110 = por %p108, %p109
    %s112 = sadd.s32 %s111, 1
    %p115 = scmp.eq.s32.totalorder %s10, 1
    %p116 = scmp.ne.s32.totalorder %s111, %s113
    %p117 = scmp.eq.s32.totalorder %s10, 0
    %p118 = por %p116, %p117
    %p119 = scmp.ne.s32.totalorder %s111, %s113
    %p120 = scmp.eq.s32.totalorder %s15, 1
    %p121 = por %p119, %p120
    %p122 = scmp.ne.s32.totalorder %s113, %s114
    %p123 = scmp.eq.s32.totalorder %s15, 0
    %p124 = por %p122, %p123
    %p125 = scmp.ne.s32.totalorder %s113, %s114
    %p126 = scmp.eq.s32.totalorder %s16, 1
    %p127 = por %p125, %p126
    %p129 = scmp.ne.s32.totalorder %s114, %s128
    %p130 = scmp.eq.s32.totalorder %s16, 0
    %p131 = por %p129, %p130
    %s132 = ssub.s32 %s17, %s29
    %s133 = ssub.s32 %s18, %s25
    %s134 = sor.u32 %s132, %s133
    %p135 = scmp.eq.s32.totalorder %s134, 0
    %s137 = sadd.s32 %s136, 1
    %s138 = scalar_select %p135, %s136, %s137
    %p141 = pneg %p135
    %p142 = scmp.eq.s32.totalorder %s10, 1
    %p143 = por %p141, %p142
    %p144 = scmp.ne.s32.totalorder %s136, %s139
    %p145 = scmp.eq.s32.totalorder %s10, 0
    %p146 = por %p144, %p145
    %p147 = scmp.ne.s32.totalorder %s136, %s139
    %p148 = scmp.eq.s32.totalorder %s15, 1
    %p149 = por %p147, %p148
    %p150 = scmp.ne.s32.totalorder %s139, %s140
    %p151 = scmp.eq.s32.totalorder %s15, 0
    %p152 = por %p150, %p151
    %p153 = scmp.ne.s32.totalorder %s139, %s140
    %p154 = scmp.eq.s32.totalorder %s16, 1
    %p155 = por %p153, %p154
    %p157 = scmp.ne.s32.totalorder %s140, %s156
    %p158 = scmp.eq.s32.totalorder %s16, 0
    %p159 = por %p157, %p158
    %p160 = scmp.le.s32.totalorder 1, %s10
    %p161 = scmp.lt.s32.totalorder %s10, 3
    %p162 = pnand %p160, %p161
    %p163 = pneg %p162
    // Predicated region
    $region9: #{conv_block_forward.1} parent=5 // pred_check
      _
    $region10: #{conv_block_forward.1} parent=5 // pred_check_branch
      %165 = sbr.rel (%p162) target = $region12
    $region11: #{conv_block_forward.1} parent=5 // pred_region
      %s166 = ssub.s32 %s10, 1
      // Predicated region
      $region13: #{conv_block_forward.1} parent=11 // pred_check
        %p167 = pneg %p103
      $region14: #{conv_block_forward.1} parent=11 // pred_check_branch
        %169 = sbr.rel (%p167) target = $region16
      $region15: #{conv_block_forward.1} parent=11 // pred_region
        _
      $region16: #{conv_block_forward.1} parent=11 // pred_fallthru
        _
      // Predicated region
      $region17: #{conv_block_forward.1} parent=11 // pred_check
        %p170 = pneg %p124
      $region18: #{conv_block_forward.1} parent=11 // pred_check_branch
        %172 = sbr.rel (%p170) target = $region20
      $region19: #{conv_block_forward.1} parent=11 // pred_region
        _
      $region20: #{conv_block_forward.1} parent=11 // pred_fallthru
        _
    $region12: #{conv_block_forward.1} parent=5 // pred_fallthru
      _
    %p173 = scmp.lt.s32.totalorder %s10, 2
    // Predicated region
    $region21: #{conv_block_forward.1} parent=5 // pred_check
      %p174 = pneg %p173
    $region22: #{conv_block_forward.1} parent=5 // pred_check_branch
      %176 = sbr.rel (%p174) target = $region24
    $region23: #{conv_block_forward.1} parent=5 // pred_region
      // Predicated region
      $region25: #{conv_block_forward.1} parent=23 // pred_check
        %p177 = pneg %p44
      $region26: #{conv_block_forward.1} parent=23 // pred_check_branch
        %179 = sbr.rel (%p177) target = $region28
      $region27: #{conv_block_forward.1} parent=23 // pred_region
        %s180 = smul.u32 4, %s18
        %s181 = ssub.s32 5, %s180
        %p182 = scmp.lt.s32.totalorder %s181, 4
        %s183 = scalar_select %p182, %s181, 4
        %s184 = smul.u32 128, %s183
        %p185 = scmp.lt.s32.totalorder %s17, 1
        %s186 = scalar_select %p185, %s17, 1
        %p187 = scmp.lt.s32.totalorder %s180, 4
        %s188 = scalar_select %p187, %s180, 4
        %s189 = smul.addr %s186, 5
        %s190 = sadd.s32 %s188, %s189
        %s191 = smul.addr %s190, 8
        %s192 = scalar_lea.vmem %s0, %s191
        %s193 = smul.u32 4, %s18
        %s194 = ssub.s32 5, %s193
        %p195 = scmp.lt.s32.totalorder %s194, 4
        %s196 = scalar_select %p195, %s194, 4
        %s197 = smul.u32 128, %s196
      $region28: #{conv_block_forward.1} parent=23 // pred_fallthru
        _
      // Predicated region
      $region29: #{conv_block_forward.1} parent=23 // pred_check
        %p198 = pneg %p76
      $region30: #{conv_block_forward.1} parent=23 // pred_check_branch
        %200 = sbr.rel (%p198) target = $region32
      $region31: #{conv_block_forward.1} parent=23 // pred_region
        %s201 = sadd.s32 %s18, 1
        %s202 = smul.u32 %s201, 4
        %p203 = scmp.lt.s32.totalorder %s17, 1
        %s204 = scalar_select %p203, %s17, 1
        %p205 = scmp.lt.s32.totalorder %s202, 4
        %s206 = scalar_select %p205, %s202, 4
        %s207 = smul.addr %s204, 5
        %s208 = sadd.s32 %s206, %s207
        %s209 = smul.addr %s208, 8
        %s210 = scalar_lea.vmem %s1, %s209
        %s211 = sadd.s32 %s18, 1
        %s212 = smul.u32 %s211, 4
      $region32: #{conv_block_forward.1} parent=23 // pred_fallthru
        _
    $region24: #{conv_block_forward.1} parent=5 // pred_fallthru
      _
    %p213 = scmp.le.s32.totalorder 1, %s10
    %p214 = scmp.lt.s32.totalorder %s10, 3
    %p215 = pnand %p213, %p214
    %p216 = pneg %p215
    // Predicated region
    $region33: #{conv_block_forward.1} parent=5 // pred_check
      _
    $region34: #{conv_block_forward.1} parent=5 // pred_check_branch
      %218 = sbr.rel (%p215) target = $region36
    $region35: #{conv_block_forward.1} parent=5 // pred_region
      %s219 = ssub.s32 %s10, 1
      %s220 = smul.u32 4, %s20
      %s221 = ssub.s32 5, %s220
      %p222 = scmp.lt.s32.totalorder %s221, 4
      %s223 = scalar_select %p222, %s221, 4
      %s224 = smul.u32 128, %s223
      %p225 = scmp.lt.s32.totalorder %s19, 1
      %s226 = scalar_select %p225, %s19, 1
      %p227 = scmp.lt.s32.totalorder %s220, 4
      %s228 = scalar_select %p227, %s220, 4
      %s229 = smul.addr %s226, 5
      %s230 = sadd.s32 %s228, %s229
      %s231 = smul.addr %s230, 8
      %s232 = scalar_lea.vmem %s0, %s231
      %p233 = pneg %p50
      %p234 = pneg %p47
      %s235 = sadd.s32 %s20, 1
      %s236 = smul.u32 %s235, 4
      %p237 = scmp.lt.s32.totalorder %s19, 1
      %s238 = scalar_select %p237, %s19, 1
      %p239 = scmp.lt.s32.totalorder %s236, 4
      %s240 = scalar_select %p239, %s236, 4
      %s241 = smul.addr %s238, 5
      %s242 = sadd.s32 %s240, %s241
      %s243 = smul.addr %s242, 8
      %s244 = scalar_lea.vmem %s1, %s243
      %p245 = pneg %p82
      %p246 = pneg %p79
      %p247 = pneg %p103
      %p248 = pneg %p100
      %p249 = pneg %p124
      %p250 = pneg %p121
      %p251 = pneg %p152
      %p252 = pneg %p149
      %s253 = smul.u32 4, %s20
      %p254 = scmp.lt.s32.totalorder %s19, 1
      %s255 = scalar_select %p254, %s19, 1
      %p256 = scmp.lt.s32.totalorder %s253, 3
      %s257 = scalar_select %p256, %s253, 3
      %s258 = smul.addr %s255, 4
      %s259 = sadd.s32 %s257, %s258
      %s260 = smul.addr %s259, 8
      %s261 = scalar_lea.vmem %s4, %s260
      %s262 = smul.u32 4, %s20
      %s263 = ssub.s32 5, %s262
      %p264 = scmp.lt.s32.totalorder %s263, 4
      %s265 = scalar_select %p264, %s263, 4
      %s266 = smul.u32 128, %s265
      %p267 = scmp.lt.s32.totalorder %s19, 1
      %s268 = scalar_select %p267, %s19, 1
      %p269 = scmp.lt.s32.totalorder %s262, 4
      %s270 = scalar_select %p269, %s262, 4
      %s271 = smul.addr %s268, 5
      %s272 = sadd.s32 %s270, %s271
      %s273 = smul.addr %s272, 8
      %s274 = scalar_lea.vmem %s0, %s273
      %s275 = smul.u32 4, %s20
      %s276 = ssub.s32 5, %s275
      %p277 = scmp.lt.s32.totalorder %s276, 4
      %s278 = scalar_select %p277, %s276, 4
      %s279 = smul.u32 128, %s278
      %s280 = sadd.s32 %s20, 1
      %s281 = smul.u32 %s280, 4
      %p282 = scmp.lt.s32.totalorder %s19, 1
      %s283 = scalar_select %p282, %s19, 1
      %p284 = scmp.lt.s32.totalorder %s281, 4
      %s285 = scalar_select %p284, %s281, 4
      %s286 = smul.addr %s283, 5
      %s287 = sadd.s32 %s285, %s286
      %s288 = smul.addr %s287, 8
      %s289 = scalar_lea.vmem %s1, %s288
      %s290 = sadd.s32 %s20, 1
      %s291 = smul.u32 %s290, 4
      %s292 = smul.u32 4, %s20
      %p293 = scmp.lt.s32.totalorder %s19, 1
      %s294 = scalar_select %p293, %s19, 1
      %p295 = scmp.lt.s32.totalorder %s292, 3
      %s296 = scalar_select %p295, %s292, 3
      %s297 = smul.addr %s294, 4
      %s298 = sadd.s32 %s296, %s297
      %s299 = smul.addr %s298, 8
      %s300 = scalar_lea.vmem %s4, %s299
      %s301 = smul.u32 4, %s20
      %v302 = vld [vmem:[%s274] sm:$0xff]
      %v303 = vld [vmem:[%s274 + $0x8] sm:$0xff]
      %304 = vst [vmem:[#allocation2] sm:$0xff] %v302
      %305 = vst [vmem:[#allocation2 + $0x8] sm:$0xff] %v303
      %v306 = vld [vmem:[%s274] sm:$0xff]
      %v307 = vld [vmem:[%s274 + $0x8] sm:$0xff]
      %v308 = vld [vmem:[%s274 + $0x10] sm:$0xff]
      %312 = vrot.lane.b32.xlu0 %v306, 127
      %v313 = vpop.permute.xlu0 %312
      %314 = vrot.lane.b32.xlu0 %v307, 127
      %v315 = vpop.permute.xlu0 %314
      %316 = vrot.lane.b32.xlu0 %v308, 127
      %v317 = vpop.permute.xlu0 %316
      %vm318 = vcmask 1039360
      %v319 = vsel %vm318, %v313, %v315
      %v320 = vsel %vm318, %v315, %v317
      %323 = vst [vmem:[#allocation2 + $0x10] sm:$0xff] %v319
      %324 = vst [vmem:[#allocation2 + $0x18] sm:$0xff] %v320
      %v325 = vld [vmem:[%s274] sm:$0xff]
      %v326 = vld [vmem:[%s274 + $0x8] sm:$0xff]
      %v327 = vld [vmem:[%s274 + $0x10] sm:$0xff]
      %331 = vrot.lane.b32.xlu0 %v325, 126
      %v332 = vpop.permute.xlu0 %331
      %333 = vrot.lane.b32.xlu0 %v326, 126
      %v334 = vpop.permute.xlu0 %333
      %335 = vrot.lane.b32.xlu0 %v327, 126
      %v336 = vpop.permute.xlu0 %335
      %vm337 = vcmask 1031168
      %v338 = vsel %vm337, %v332, %v334
      %v339 = vsel %vm337, %v334, %v336
      %342 = vst [vmem:[#allocation2 + $0x20] sm:$0xff] %v338
      %343 = vst [vmem:[#allocation2 + $0x28] sm:$0xff] %v339
      %v344 = vld [vmem:[%s274] sm:$0xff]
      %v345 = vld [vmem:[%s274 + $0x8] sm:$0xff]
      %v346 = vld [vmem:[%s274 + $0x10] sm:$0xff]
      %350 = vrot.lane.b32.xlu0 %v344, 110
      %v351 = vpop.permute.xlu0 %350
      %352 = vrot.lane.b32.xlu0 %v345, 110
      %v353 = vpop.permute.xlu0 %352
      %354 = vrot.lane.b32.xlu0 %v346, 110
      %v355 = vpop.permute.xlu0 %354
      %vm356 = vcmask 900096
      %v357 = vsel %vm356, %v351, %v353
      %v358 = vsel %vm356, %v353, %v355
      %361 = vst [vmem:[#allocation2 + $0x30] sm:$0xff] %v357
      %362 = vst [vmem:[#allocation2 + $0x38] sm:$0xff] %v358
      %v363 = vld [vmem:[%s274] sm:$0xff]
      %v364 = vld [vmem:[%s274 + $0x8] sm:$0xff]
      %v365 = vld [vmem:[%s274 + $0x10] sm:$0xff]
      %369 = vrot.lane.b32.xlu0 %v363, 109
      %v370 = vpop.permute.xlu0 %369
      %371 = vrot.lane.b32.xlu0 %v364, 109
      %v372 = vpop.permute.xlu0 %371
      %373 = vrot.lane.b32.xlu0 %v365, 109
      %v374 = vpop.permute.xlu0 %373
      %vm375 = vcmask 891904
      %v376 = vsel %vm375, %v370, %v372
      %v377 = vsel %vm375, %v372, %v374
      %380 = vst [vmem:[#allocation2 + $0x40] sm:$0xff] %v376
      %381 = vst [vmem:[#allocation2 + $0x48] sm:$0xff] %v377
      %v382 = vld [vmem:[%s274] sm:$0xff]
      %v383 = vld [vmem:[%s274 + $0x8] sm:$0xff]
      %v384 = vld [vmem:[%s274 + $0x10] sm:$0xff]
      %388 = vrot.lane.b32.xlu0 %v382, 108
      %v389 = vpop.permute.xlu0 %388
      %390 = vrot.lane.b32.xlu0 %v383, 108
      %v391 = vpop.permute.xlu0 %390
      %392 = vrot.lane.b32.xlu0 %v384, 108
      %v393 = vpop.permute.xlu0 %392
      %vm394 = vcmask 883712
      %v395 = vsel %vm394, %v389, %v391
      %v396 = vsel %vm394, %v391, %v393
      %399 = vst [vmem:[#allocation2 + $0x50] sm:$0xff] %v395
      %400 = vst [vmem:[#allocation2 + $0x58] sm:$0xff] %v396
      %v401 = vld [vmem:[%s274] sm:$0xff]
      %v402 = vld [vmem:[%s274 + $0x8] sm:$0xff]
      %v403 = vld [vmem:[%s274 + $0x10] sm:$0xff]
      %407 = vrot.lane.b32.xlu0 %v401, 92
      %v408 = vpop.permute.xlu0 %407
      %409 = vrot.lane.b32.xlu0 %v402, 92
      %v410 = vpop.permute.xlu0 %409
      %411 = vrot.lane.b32.xlu0 %v403, 92
      %v412 = vpop.permute.xlu0 %411
      %vm413 = vcmask 752640
      %v414 = vsel %vm413, %v408, %v410
      %v415 = vsel %vm413, %v410, %v412
      %418 = vst [vmem:[#allocation2 + $0x60] sm:$0xff] %v414
      %419 = vst [vmem:[#allocation2 + $0x68] sm:$0xff] %v415
      %v420 = vld [vmem:[%s274] sm:$0xff]
      %v421 = vld [vmem:[%s274 + $0x8] sm:$0xff]
      %v422 = vld [vmem:[%s274 + $0x10] sm:$0xff]
      %426 = vrot.lane.b32.xlu0 %v420, 91
      %v427 = vpop.permute.xlu0 %426
      %428 = vrot.lane.b32.xlu0 %v421, 91
      %v429 = vpop.permute.xlu0 %428
      %430 = vrot.lane.b32.xlu0 %v422, 91
      %v431 = vpop.permute.xlu0 %430
      %vm432 = vcmask 744448
      %v433 = vsel %vm432, %v427, %v429
      %v434 = vsel %vm432, %v429, %v431
      %437 = vst [vmem:[#allocation2 + $0x70] sm:$0xff] %v433
      %438 = vst [vmem:[#allocation2 + $0x78] sm:$0xff] %v434
      %v439 = vld [vmem:[%s274] sm:$0xff]
      %v440 = vld [vmem:[%s274 + $0x8] sm:$0xff]
      %v441 = vld [vmem:[%s274 + $0x10] sm:$0xff]
      %445 = vrot.lane.b32.xlu0 %v439, 90
      %v446 = vpop.permute.xlu0 %445
      %447 = vrot.lane.b32.xlu0 %v440, 90
      %v448 = vpop.permute.xlu0 %447
      %449 = vrot.lane.b32.xlu0 %v441, 90
      %v450 = vpop.permute.xlu0 %449
      %vm451 = vcmask 736256
      %v452 = vsel %vm451, %v446, %v448
      %v453 = vsel %vm451, %v448, %v450
      %456 = vst [vmem:[#allocation2 + $0x80] sm:$0xff] %v452
      %457 = vst [vmem:[#allocation2 + $0x88] sm:$0xff] %v453
      %v458 = vld [vmem:[#allocation2] sm:$0xff]
      %v459 = vld [vmem:[#allocation2 + $0x8] sm:$0xff]
      %v460 = vld [vmem:[#allocation2 + $0x10] sm:$0xff]
      %v461 = vld [vmem:[#allocation2 + $0x18] sm:$0xff]
      %v462 = vld [vmem:[#allocation2 + $0x20] sm:$0xff]
      %v463 = vld [vmem:[#allocation2 + $0x28] sm:$0xff]
      %v464 = vld [vmem:[#allocation2 + $0x30] sm:$0xff]
      %v465 = vld [vmem:[#allocation2 + $0x38] sm:$0xff]
      %v466 = vld [vmem:[#allocation2 + $0x40] sm:$0xff]
      %v467 = vld [vmem:[#allocation2 + $0x48] sm:$0xff]
      %v468 = vld [vmem:[#allocation2 + $0x50] sm:$0xff]
      %v469 = vld [vmem:[#allocation2 + $0x58] sm:$0xff]
      %v470 = vld [vmem:[#allocation2 + $0x60] sm:$0xff]
      %v471 = vld [vmem:[#allocation2 + $0x68] sm:$0xff]
      %v472 = vld [vmem:[#allocation2 + $0x70] sm:$0xff]
      %v473 = vld [vmem:[#allocation2 + $0x78] sm:$0xff]
      %v474 = vld [vmem:[#allocation2 + $0x80] sm:$0xff]
      %v475 = vld [vmem:[#allocation2 + $0x88] sm:$0xff]
      %v476 = vld [vmem:[%s2] sm:$0xff]
      %v477 = vld [vmem:[%s3] sm:$0xff]
      %479 = vset.pattern.permute.xlu0 0
      %480 = vperm.xlu0 %479, %v477
      %v481 = vpop.permute.xlu0 %480
      %vm483 = vcmask 588800
      %v485 = vsel %vm483, %v476, 0
      %487 = vmatprep.subr.mxu0 0.0
      %488 = vmatpush1.msra.mxu0 0.0
      %489 = vmatprep.subr.mxu0 0.0
      %490 = vmatpush1.msra.mxu0 0.0
      %491 = vmatprep.subr.mxu0 0.0
      %492 = vmatpush1.msra.mxu0 0.0
      %493 = vmatprep.subr.mxu0 0.0
      %494 = vmatpush1.msra.mxu0 0.0
      %495 = vmatprep.subr.mxu0 0.0
      %496 = vmatpush1.msra.mxu0 0.0
      %497 = vmatprep.subr.mxu0 0.0
      %498 = vmatpush1.msra.mxu0 0.0
      %499 = vmatprep.subr.mxu0 0.0
      %500 = vmatpush1.msra.mxu0 0.0
      %501 = vmatprep.subr.mxu0 %v475
      %502 = vmatpush1.msra.mxu0 %v474
      %503 = vmatprep.subr.mxu0 %v473
      %504 = vmatpush1.msra.mxu0 %v472
      %505 = vmatprep.subr.mxu0 %v471
      %506 = vmatpush1.msra.mxu0 %v470
      %507 = vmatprep.subr.mxu0 %v469
      %508 = vmatpush1.msra.mxu0 %v468
      %509 = vmatprep.subr.mxu0 %v467
      %510 = vmatpush1.msra.mxu0 %v466
      %511 = vmatprep.subr.mxu0 %v465
      %512 = vmatpush1.msra.mxu0 %v464
      %513 = vmatprep.subr.mxu0 %v463
      %514 = vmatpush1.msra.mxu0 %v462
      %515 = vmatprep.subr.mxu0 %v461
      %516 = vmatpush1.msra.mxu0 %v460
      %517 = vmatprep.subr.mxu0 %v459
      %518 = vmatpush1.msra.mxu0 %v458
      %519 = vmatprep.subr.mxu0 0.0
      %520 = vmatpush2.msra.mxu0 0.0
      %521 = vmatprep.subr.mxu0 0.0
      %522 = vmatpush2.msra.mxu0 0.0
      %523 = vmatprep.subr.mxu0 0.0
      %524 = vmatpush2.msra.mxu0 0.0
      %525 = vmatprep.subr.mxu0 0.0
      %526 = vmatpush2.msra.mxu0 0.0
      %527 = vmatprep.subr.mxu0 0.0
      %528 = vmatpush2.msra.mxu0 0.0
      %529 = vmatprep.subr.mxu0 0.0
      %530 = vmatpush2.msra.mxu0 0.0
      %531 = vmatprep.subr.mxu0 0.0
      %532 = vmatpush2.msra.mxu0 0.0
      %533 = vmatprep.subr.mxu0 0.0
      %534 = vmatpush2.msra.mxu0 0.0
      %535 = vmatprep.subr.mxu0 0.0
      %536 = vmatpush2.msra.mxu0 0.0
      %537 = vmatprep.subr.mxu0 0.0
      %538 = vmatpush2.msra.mxu0 0.0
      %539 = vmatprep.subr.mxu0 0.0
      %540 = vmatpush2.msra.mxu0 0.0
      %541 = vmatprep.subr.mxu0 0.0
      %542 = vmatpush2.msra.mxu0 0.0
      %543 = vmatprep.subr.mxu0 0.0
      %544 = vmatpush2.msra.mxu0 0.0
      %545 = vmatprep.subr.mxu0 0.0
      %546 = vmatpush2.msra.mxu0 0.0
      %547 = vmatprep.subr.mxu0 0.0
      %548 = vmatpush2.msra.mxu0 0.0
      %549 = vmatprep.subr.mxu0 0.0
      %550 = vmatpush2.msra.mxu0 0.0
      %551 = vmatprep.mubr.f32.mxu0 0.0
      %552 = vmatmul.mubr.f32.gmra.mxu0 %v485
      %v553 = vpop.f32.mrf.mxu0
      %v554 = vadd.f32 %v481, %v553
      %v555 = vpop.f32.mrf.mxu0
      %v556 = vadd.f32 %v481, %v555
      %557 = vdwg.mxu0
      %v558 = vmax.f32 %v554, 0.0
      %v559 = vmax.f32 %v556, 0.0
      %560 = vst [vmem:[%s300] sm:$0xff] %v558
      %561 = vst [vmem:[%s300 + $0x8] sm:$0xff] %v559
      %v562 = vld [vmem:[%s274 + $0x10] sm:$0xff]
      %v563 = vld [vmem:[%s274 + $0x18] sm:$0xff]
      %564 = vst [vmem:[#allocation2] sm:$0xff] %v562
      %565 = vst [vmem:[#allocation2 + $0x8] sm:$0xff] %v563
      %v566 = vld [vmem:[%s274 + $0x10] sm:$0xff]
      %v567 = vld [vmem:[%s274 + $0x18] sm:$0xff]
      %570 = vrot.lane.b32.xlu0 %v566, 127
      %v571 = vpop.permute.xlu0 %570
      %572 = vrot.lane.b32.xlu0 %v567, 127
      %v573 = vpop.permute.xlu0 %572
      %v574 = vsel %vm318, %v571, %v573
      %577 = vst [vmem:[#allocation2 + $0x10] sm:$0xff] %v574
      %578 = vst.msk [vmem:[#allocation2 + $0x18] sm:$0xff] %vm318, %v573
      %v579 = vld [vmem:[%s289] sm:$0xff]
      %581 = vrot.lane.b32.xlu0 %v579, 127
      %v582 = vpop.permute.xlu0 %581
      %vm584 = vcmask 1048568
      %585 = vst.msk [vmem:[#allocation2 + $0x18] sm:$0xff] %vm584, %v582
      %v586 = vld [vmem:[%s274 + $0x10] sm:$0xff]
      %v587 = vld [vmem:[%s274 + $0x18] sm:$0xff]
      %590 = vrot.lane.b32.xlu0 %v586, 126
      %v591 = vpop.permute.xlu0 %590
      %592 = vrot.lane.b32.xlu0 %v587, 126
      %v593 = vpop.permute.xlu0 %592
      %v594 = vsel %vm337, %v591, %v593
      %597 = vst [vmem:[#allocation2 + $0x20] sm:$0xff] %v594
      %598 = vst.msk [vmem:[#allocation2 + $0x28] sm:$0xff] %vm337, %v593
      %v599 = vld [vmem:[%s289] sm:$0xff]
      %601 = vrot.lane.b32.xlu0 %v599, 126
      %v602 = vpop.permute.xlu0 %601
      %vm604 = vcmask 1048560
      %605 = vst.msk [vmem:[#allocation2 + $0x28] sm:$0xff] %vm604, %v602
      %v606 = vld [vmem:[%s274 + $0x10] sm:$0xff]
      %v607 = vld [vmem:[%s274 + $0x18] sm:$0xff]
      %610 = vrot.lane.b32.xlu0 %v606, 110
      %v611 = vpop.permute.xlu0 %610
      %612 = vrot.lane.b32.xlu0 %v607, 110
      %v613 = vpop.permute.xlu0 %612
      %v614 = vsel %vm356, %v611, %v613
      %617 = vst [vmem:[#allocation2 + $0x30] sm:$0xff] %v614
      %618 = vst.msk [vmem:[#allocation2 + $0x38] sm:$0xff] %vm356, %v613
      %v619 = vld [vmem:[%s289] sm:$0xff]
      %621 = vrot.lane.b32.xlu0 %v619, 110
      %v622 = vpop.permute.xlu0 %621
      %vm624 = vcmask 1048432
      %625 = vst.msk [vmem:[#allocation2 + $0x38] sm:$0xff] %vm624, %v622
      %v626 = vld [vmem:[%s274 + $0x10] sm:$0xff]
      %v627 = vld [vmem:[%s274 + $0x18] sm:$0xff]
      %630 = vrot.lane.b32.xlu0 %v626, 109
      %v631 = vpop.permute.xlu0 %630
      %632 = vrot.lane.b32.xlu0 %v627, 109
      %v633 = vpop.permute.xlu0 %632
      %v634 = vsel %vm375, %v631, %v633
      %637 = vst [vmem:[#allocation2 + $0x40] sm:$0xff] %v634
      %638 = vst.msk [vmem:[#allocation2 + $0x48] sm:$0xff] %vm375, %v633
      %v639 = vld [vmem:[%s289] sm:$0xff]
      %641 = vrot.lane.b32.xlu0 %v639, 109
      %v642 = vpop.permute.xlu0 %641
      %vm644 = vcmask 1048424
      %645 = vst.msk [vmem:[#allocation2 + $0x48] sm:$0xff] %vm644, %v642
      %v646 = vld [vmem:[%s274 + $0x10] sm:$0xff]
      %v647 = vld [vmem:[%s274 + $0x18] sm:$0xff]
      %650 = vrot.lane.b32.xlu0 %v646, 108
      %v651 = vpop.permute.xlu0 %650
      %652 = vrot.lane.b32.xlu0 %v647, 108
      %v653 = vpop.permute.xlu0 %652
      %v654 = vsel %vm394, %v651, %v653
      %657 = vst [vmem:[#allocation2 + $0x50] sm:$0xff] %v654
      %658 = vst.msk [vmem:[#allocation2 + $0x58] sm:$0xff] %vm394, %v653
      %v659 = vld [vmem:[%s289] sm:$0xff]
      %661 = vrot.lane.b32.xlu0 %v659, 108
      %v662 = vpop.permute.xlu0 %661
      %vm664 = vcmask 1048416
      %665 = vst.msk [vmem:[#allocation2 + $0x58] sm:$0xff] %vm664, %v662
      %v666 = vld [vmem:[%s274 + $0x10] sm:$0xff]
      %v667 = vld [vmem:[%s274 + $0x18] sm:$0xff]
      %670 = vrot.lane.b32.xlu0 %v666, 92
      %v671 = vpop.permute.xlu0 %670
      %672 = vrot.lane.b32.xlu0 %v667, 92
      %v673 = vpop.permute.xlu0 %672
      %v674 = vsel %vm413, %v671, %v673
      %677 = vst [vmem:[#allocation2 + $0x60] sm:$0xff] %v674
      %678 = vst.msk [vmem:[#allocation2 + $0x68] sm:$0xff] %vm413, %v673
      %v679 = vld [vmem:[%s289] sm:$0xff]
      %681 = vrot.lane.b32.xlu0 %v679, 92
      %v682 = vpop.permute.xlu0 %681
      %vm684 = vcmask 1048288
      %685 = vst.msk [vmem:[#allocation2 + $0x68] sm:$0xff] %vm684, %v682
      %v686 = vld [vmem:[%s274 + $0x10] sm:$0xff]
      %v687 = vld [vmem:[%s274 + $0x18] sm:$0xff]
      %690 = vrot.lane.b32.xlu0 %v686, 91
      %v691 = vpop.permute.xlu0 %690
      %692 = vrot.lane.b32.xlu0 %v687, 91
      %v693 = vpop.permute.xlu0 %692
      %v694 = vsel %vm432, %v691, %v693
      %697 = vst [vmem:[#allocation2 + $0x70] sm:$0xff] %v694
      %698 = vst.msk [vmem:[#allocation2 + $0x78] sm:$0xff] %vm432, %v693
      %v699 = vld [vmem:[%s289] sm:$0xff]
      %701 = vrot.lane.b32.xlu0 %v699, 91
      %v702 = vpop.permute.xlu0 %701
      %vm704 = vcmask 1048280
      %705 = vst.msk [vmem:[#allocation2 + $0x78] sm:$0xff] %vm704, %v702
      %v706 = vld [vmem:[%s274 + $0x10] sm:$0xff]
      %v707 = vld [vmem:[%s274 + $0x18] sm:$0xff]
      %710 = vrot.lane.b32.xlu0 %v706, 90
      %v711 = vpop.permute.xlu0 %710
      %712 = vrot.lane.b32.xlu0 %v707, 90
      %v713 = vpop.permute.xlu0 %712
      %v714 = vsel %vm451, %v711, %v713
      %717 = vst [vmem:[#allocation2 + $0x80] sm:$0xff] %v714
      %718 = vst.msk [vmem:[#allocation2 + $0x88] sm:$0xff] %vm451, %v713
      %v719 = vld [vmem:[%s289] sm:$0xff]
      %721 = vrot.lane.b32.xlu0 %v719, 90
      %v722 = vpop.permute.xlu0 %721
      %vm724 = vcmask 1048272
      %725 = vst.msk [vmem:[#allocation2 + $0x88] sm:$0xff] %vm724, %v722
      %v726 = vld [vmem:[#allocation2] sm:$0xff]
      %v727 = vld [vmem:[#allocation2 + $0x8] sm:$0xff]
      %v728 = vld [vmem:[#allocation2 + $0x10] sm:$0xff]
      %v729 = vld [vmem:[#allocation2 + $0x18] sm:$0xff]
      %v730 = vld [vmem:[#allocation2 + $0x20] sm:$0xff]
      %v731 = vld [vmem:[#allocation2 + $0x28] sm:$0xff]
      %v732 = vld [vmem:[#allocation2 + $0x30] sm:$0xff]
      %v733 = vld [vmem:[#allocation2 + $0x38] sm:$0xff]
      %v734 = vld [vmem:[#allocation2 + $0x40] sm:$0xff]
      %v735 = vld [vmem:[#allocation2 + $0x48] sm:$0xff]
      %v736 = vld [vmem:[#allocation2 + $0x50] sm:$0xff]
      %v737 = vld [vmem:[#allocation2 + $0x58] sm:$0xff]
      %v738 = vld [vmem:[#allocation2 + $0x60] sm:$0xff]
      %v739 = vld [vmem:[#allocation2 + $0x68] sm:$0xff]
      %v740 = vld [vmem:[#allocation2 + $0x70] sm:$0xff]
      %v741 = vld [vmem:[#allocation2 + $0x78] sm:$0xff]
      %v742 = vld [vmem:[#allocation2 + $0x80] sm:$0xff]
      %v743 = vld [vmem:[#allocation2 + $0x88] sm:$0xff]
      %v744 = vld [vmem:[%s2] sm:$0xff]
      %v745 = vld [vmem:[%s3] sm:$0xff]
      %747 = vset.pattern.permute.xlu0 0
      %748 = vperm.xlu0 %747, %v745
      %v749 = vpop.permute.xlu0 %748
      %v752 = vsel %vm483, %v744, 0
      %754 = vmatprep.subr.mxu0 0.0
      %755 = vmatpush1.msra.mxu0 0.0
      %756 = vmatprep.subr.mxu0 0.0
      %757 = vmatpush1.msra.mxu0 0.0
      %758 = vmatprep.subr.mxu0 0.0
      %759 = vmatpush1.msra.mxu0 0.0
      %760 = vmatprep.subr.mxu0 0.0
      %761 = vmatpush1.msra.mxu0 0.0
      %762 = vmatprep.subr.mxu0 0.0
      %763 = vmatpush1.msra.mxu0 0.0
      %764 = vmatprep.subr.mxu0 0.0
      %765 = vmatpush1.msra.mxu0 0.0
      %766 = vmatprep.subr.mxu0 0.0
      %767 = vmatpush1.msra.mxu0 0.0
      %768 = vmatprep.subr.mxu0 %v743
      %769 = vmatpush1.msra.mxu0 %v742
      %770 = vmatprep.subr.mxu0 %v741
      %771 = vmatpush1.msra.mxu0 %v740
      %772 = vmatprep.subr.mxu0 %v739
      %773 = vmatpush1.msra.mxu0 %v738
      %774 = vmatprep.subr.mxu0 %v737
      %775 = vmatpush1.msra.mxu0 %v736
      %776 = vmatprep.subr.mxu0 %v735
      %777 = vmatpush1.msra.mxu0 %v734
      %778 = vmatprep.subr.mxu0 %v733
      %779 = vmatpush1.msra.mxu0 %v732
      %780 = vmatprep.subr.mxu0 %v731
      %781 = vmatpush1.msra.mxu0 %v730
      %782 = vmatprep.subr.mxu0 %v729
      %783 = vmatpush1.msra.mxu0 %v728
      %784 = vmatprep.subr.mxu0 %v727
      %785 = vmatpush1.msra.mxu0 %v726
      %786 = vmatprep.subr.mxu0 0.0
      %787 = vmatpush2.msra.mxu0 0.0
      %788 = vmatprep.subr.mxu0 0.0
      %789 = vmatpush2.msra.mxu0 0.0
      %790 = vmatprep.subr.mxu0 0.0
      %791 = vmatpush2.msra.mxu0 0.0
      %792 = vmatprep.subr.mxu0 0.0
      %793 = vmatpush2.msra.mxu0 0.0
      %794 = vmatprep.subr.mxu0 0.0
      %795 = vmatpush2.msra.mxu0 0.0
      %796 = vmatprep.subr.mxu0 0.0
      %797 = vmatpush2.msra.mxu0 0.0
      %798 = vmatprep.subr.mxu0 0.0
      %799 = vmatpush2.msra.mxu0 0.0
      %800 = vmatprep.subr.mxu0 0.0
      %801 = vmatpush2.msra.mxu0 0.0
      %802 = vmatprep.subr.mxu0 0.0
      %803 = vmatpush2.msra.mxu0 0.0
      %804 = vmatprep.subr.mxu0 0.0
      %805 = vmatpush2.msra.mxu0 0.0
      %806 = vmatprep.subr.mxu0 0.0
      %807 = vmatpush2.msra.mxu0 0.0
      %808 = vmatprep.subr.mxu0 0.0
      %809 = vmatpush2.msra.mxu0 0.0
      %810 = vmatprep.subr.mxu0 0.0
      %811 = vmatpush2.msra.mxu0 0.0
      %812 = vmatprep.subr.mxu0 0.0
      %813 = vmatpush2.msra.mxu0 0.0
      %814 = vmatprep.subr.mxu0 0.0
      %815 = vmatpush2.msra.mxu0 0.0
      %816 = vmatprep.subr.mxu0 0.0
      %817 = vmatpush2.msra.mxu0 0.0
      %818 = vmatprep.mubr.f32.mxu0 0.0
      %819 = vmatmul.mubr.f32.gmra.mxu0 %v752
      %v820 = vpop.f32.mrf.mxu0
      %v821 = vadd.f32 %v749, %v820
      %v822 = vpop.f32.mrf.mxu0
      %v823 = vadd.f32 %v749, %v822
      %824 = vdwg.mxu0
      %v825 = vmax.f32 %v821, 0.0
      %v826 = vmax.f32 %v823, 0.0
      %827 = vst [vmem:[%s300 + $0x10] sm:$0xff] %v825
      %828 = vst [vmem:[%s300 + $0x18] sm:$0xff] %v826
      %s829 = smul.u32 4, %s20
      %p830 = scmp.lt.s32.totalorder %s19, 1
      %s831 = scalar_select %p830, %s19, 1
      %p832 = scmp.lt.s32.totalorder %s829, 3
      %s833 = scalar_select %p832, %s829, 3
      %s834 = smul.addr %s831, 4
      %s835 = sadd.s32 %s833, %s834
      %s836 = smul.addr %s835, 8
      %s837 = scalar_lea.vmem %s4, %s836
      // Predicated region
      $region37: #{conv_block_forward.1} parent=35 // pred_check
        %p838 = pneg %p149
      $region38: #{conv_block_forward.1} parent=35 // pred_check_branch
        %840 = sbr.rel (%p838) target = $region40
      $region39: #{conv_block_forward.1} parent=35 // pred_region
        %s841 = smul.u32 4, %s20
      $region40: #{conv_block_forward.1} parent=35 // pred_fallthru
        _
    $region36: #{conv_block_forward.1} parent=5 // pred_fallthru
      _
    %p842 = scmp.le.s32.totalorder 2, %s10
    // Predicated region
    $region41: #{conv_block_forward.1} parent=5 // pred_check
      %p843 = pneg %p842
    $region42: #{conv_block_forward.1} parent=5 // pred_check_branch
      %845 = sbr.rel (%p843) target = $region44
    $region43: #{conv_block_forward.1} parent=5 // pred_region
      %s846 = ssub.s32 %s10, 2
      // Predicated region
      $region45: #{conv_block_forward.1} parent=43 // pred_check
        %p847 = pneg %p155
      $region46: #{conv_block_forward.1} parent=43 // pred_check_branch
        %849 = sbr.rel (%p847) target = $region48
      $region47: #{conv_block_forward.1} parent=43 // pred_region
        %s850 = smul.u32 4, %s22
        %p851 = scmp.lt.s32.totalorder %s21, 1
        %s852 = scalar_select %p851, %s21, 1
        %p853 = scmp.lt.s32.totalorder %s850, 3
        %s854 = scalar_select %p853, %s850, 3
        %s855 = smul.addr %s852, 4
        %s856 = sadd.s32 %s854, %s855
        %s857 = smul.addr %s856, 8
        %s858 = scalar_lea.vmem %s4, %s857
      $region48: #{conv_block_forward.1} parent=43 // pred_fallthru
        _
    $region44: #{conv_block_forward.1} parent=5 // pred_fallthru
      _
  $region6: #{conv_block_forward.1} parent=0 // loop_footer
    %s14 = sadd.s32 1, %s10
  $region7: #{conv_block_forward.1} parent=0 // loop_footer_branch
    %9 = sbr.rel target = $region3
  $region8: #{conv_block_forward.1} parent=0 // loop_exit
    _

</llo_original>
